<compile_context>
chip_gen: v7x
topology: tpu7x:2x2x1
jax: 0.10.0
libtpu: 0.0.40
codegen_flags: <defaults>
</compile_context>

<pallas_src>
import functools

import jax
import jax.numpy as jnp
from jax import lax
from jax.experimental import pallas as pl
from jax.experimental.pallas import tpu as pltpu


# ----------------------------------------------------------------------------
# helpers
# ----------------------------------------------------------------------------
def _pick_tile(n, target, multiple=8):
    """Largest divisor of n that is <= target and a multiple of `multiple`.

    Falls back to n (full extent) if no such divisor exists -- a full-extent
    block is always legal for the (8,128) BlockSpec rule.
    """
    if n <= target:
        return n
    for d in range(target, 0, -1):
        if n % d == 0 and d % multiple == 0:
            return d
    return n


# ----------------------------------------------------------------------------
# Kernel A1: 1x1 conv (as matmul) + per-image channel-sum accumulation
# ----------------------------------------------------------------------------
def _conv1x1_sum_kernel(x_ref, w_ref, y_ref, sum_ref):
    t = pl.program_id(1)
    y = jnp.dot(x_ref[0], w_ref[...], preferred_element_type=jnp.float32)  # (tm, Cout)

    @pl.when(t == 0)
    def _init():
        sum_ref[...] = jnp.zeros_like(sum_ref)

    sum_ref[...] += jnp.sum(y, axis=0, keepdims=True)[None]
    y_ref[0] = y.astype(y_ref.dtype)


def conv1x1_with_sums(x_flat, w, *, y_dtype):
    """x_flat: (N, HW, Cin).  Returns y (N, HW, Cout) and channel sums (N,1,Cout) f32."""
    N, HW, Cin = x_flat.shape
    Cout = w.shape[-1]
    tm = _pick_tile(HW, 512)
    grid = (N, HW // tm)
    return pl.pallas_call(
        _conv1x1_sum_kernel,
        out_shape=(jax.ShapeDtypeStruct((N, HW, Cout), y_dtype),
                   jax.ShapeDtypeStruct((N, 1, Cout), jnp.float32)),
        grid=grid,
        in_specs=[
            pl.BlockSpec((1, tm, Cin), lambda n, t: (n, t, 0)),
            pl.BlockSpec((Cin, Cout), lambda n, t: (0, 0)),
        ],
        out_specs=(
            pl.BlockSpec((1, tm, Cout), lambda n, t: (n, t, 0)),
            pl.BlockSpec((1, 1, Cout), lambda n, t: (n, 0, 0)),
        ),
        compiler_params=pltpu.CompilerParams(
            dimension_semantics=("parallel", "arbitrary")),
    )(x_flat, w)


# ----------------------------------------------------------------------------
# Kernel A2: 3x3 conv (9 shifted matmuls over a DMA'd halo band) + channel sums.
# Also applies a per-channel *input* scale (used to fold in5's SE scale).
# ----------------------------------------------------------------------------
def _conv3x3_sum_kernel(x_hbm, scale_ref, w_ref, y_ref, sum_ref,
                        band_ref, sem_ref, *, Wp, tr, band_len):
    n = pl.program_id(0)
    t = pl.program_id(1)
    n_t = pl.num_programs(1)

    def _copy(tt, slot):
        return pltpu.make_async_copy(
            x_hbm.at[n, pl.ds(tt * tr * Wp, band_len), :],
            band_ref.at[slot],
            sem_ref.at[slot],
        )

    @pl.when(t == 0)
    def _first():
        _copy(0, 0).start()

    slot = t % 2
    _copy(t, slot).wait()

    @pl.when(t + 1 < n_t)
    def _prefetch():
        _copy(t + 1, (t + 1) % 2).start()

    # per-channel input scale (f32), then back to the MXU compute dtype.
    xs = (band_ref[slot] * scale_ref[0]).astype(w_ref.dtype)   # (band_len, Cin)

    rows = tr * Wp
    cout = w_ref.shape[-1]
    acc = jnp.zeros((rows, cout), jnp.float32)
    for ky in range(3):
        for kx in range(3):
            off = ky * Wp + kx
            acc = acc + jnp.dot(xs[off:off + rows, :], w_ref[3 * ky + kx],
                                preferred_element_type=jnp.float32)

    # mask out the left/right zero-padding columns for the SE global mean.
    col = lax.rem(lax.broadcasted_iota(jnp.int32, (rows, 1), 0), Wp)
    valid = jnp.logical_and(col != 0, col != Wp - 1)

    @pl.when(t == 0)
    def _init():
        sum_ref[...] = jnp.zeros_like(sum_ref)

    sum_ref[...] += jnp.sum(jnp.where(valid, acc, 0.0), axis=0, keepdims=True)[None]
    y_ref[0] = acc.astype(y_ref.dtype)


def conv3x3_with_sums(x_nhwc, in_scale, w9, *, y_dtype):
    """x_nhwc: (N,H,W,Cin); in_scale: (N,1,Cin) f32; w9: (9,Cin,Cout) (ky-major taps).

    Returns y in padded-column layout (N, H*(W+2), Cout) plus channel sums (N,1,Cout)
    computed over the real H*W positions only.
    """
    N, H, W, Cin = x_nhwc.shape
    Cout = w9.shape[-1]
    Wp = W + 2
    # zero-pad spatially by 1, flatten spatial, add a 1-element guard front/back
    # so all 9 shifted slices stay in-bounds.
    xp = jnp.pad(x_nhwc, ((0, 0), (1, 1), (1, 1), (0, 0)))
    xg = jnp.pad(xp.reshape(N, (H + 2) * Wp, Cin), ((0, 0), (1, 1), (0, 0)))

    tr = _pick_tile(H, max(1, 2048 // Wp), multiple=8)
    band_len = (tr + 2) * Wp + 2
    grid = (N, H // tr)
    kernel = functools.partial(_conv3x3_sum_kernel, Wp=Wp, tr=tr, band_len=band_len)
    return pl.pallas_call(
        kernel,
        out_shape=(jax.ShapeDtypeStruct((N, H * Wp, Cout), y_dtype),
                   jax.ShapeDtypeStruct((N, 1, Cout), jnp.float32)),
        grid=grid,
        in_specs=[
            pl.BlockSpec(memory_space=pl.ANY),                       # raw HBM, manual DMA
            pl.BlockSpec((1, 1, Cin), lambda n, t: (n, 0, 0)),
            pl.BlockSpec((9, Cin, Cout), lambda n, t: (0, 0, 0)),
        ],
        out_specs=(
            pl.BlockSpec((1, tr * Wp, Cout), lambda n, t: (n, t, 0)),
            pl.BlockSpec((1, 1, Cout), lambda n, t: (n, 0, 0)),
        ),
        scratch_shapes=[
            pltpu.VMEM((2, band_len, Cin), x_nhwc.dtype),            # double-buffered band
            pltpu.SemaphoreType.DMA((2,)),
        ],
        compiler_params=pltpu.CompilerParams(
            dimension_semantics=("parallel", "arbitrary")),
    )(xg, in_scale, w9)


# ----------------------------------------------------------------------------
# Kernel C: fused  out = fine*sf + upsample2x(coarse*sc)   (FPN top-down merge)
# ----------------------------------------------------------------------------
def _merge_up2_kernel(fine_ref, sf_ref, coarse_ref, sc_ref, o_ref):
    f = fine_ref[...].astype(jnp.float32)                    # (1, tr, 2, Wc, 2C)
    sf = sf_ref[...]                                         # (1, 1, C)
    sf2 = jnp.concatenate([sf, sf], axis=-1)                 # (1, 1, 2C)
    c = coarse_ref[...].astype(jnp.float32) * sc_ref[...]    # (1, tr, Wc, C)
    cc = jnp.concatenate([c, c], axis=-1)                    # (1, tr, Wc, 2C) == W-upsample
    o_ref[...] = (f * sf2 + cc[:, :, None, :, :]).astype(o_ref.dtype)


def merge_upsample_add(fine_flat, sf, coarse_nhwc, sc, H, W, C, *, out_dtype):
    """fine_flat: (N,H*W,C), coarse_nhwc: (N,H/2,W/2,C), sf/sc: (N,1,C) f32.
    Returns (N,H,W,C) = fine*sf + nearest_up2(coarse*sc)."""
    N = fine_flat.shape[0]
    Hc, Wc = H // 2, W // 2
    # free, contiguous views: pack the 2x2 fine pixels as (row-pair, 2C lanes)
    fine_v = fine_flat.reshape(N, Hc, 2, Wc, 2 * C)
    tr = _pick_tile(Hc, max(1, 4096 // max(1, 2 * W)), multiple=1)
    out = pl.pallas_call(
        _merge_up2_kernel,
        out_shape=jax.ShapeDtypeStruct((N, Hc, 2, Wc, 2 * C), out_dtype),
        grid=(N, Hc // tr),
        in_specs=[
            pl.BlockSpec((1, tr, 2, Wc, 2 * C), lambda n, t: (n, t, 0, 0, 0)),
            pl.BlockSpec((1, 1, C), lambda n, t: (n, 0, 0)),
            pl.BlockSpec((1, tr, Wc, C), lambda n, t: (n, t, 0, 0)),
            pl.BlockSpec((1, 1, C), lambda n, t: (n, 0, 0)),
        ],
        out_specs=pl.BlockSpec((1, tr, 2, Wc, 2 * C), lambda n, t: (n, t, 0, 0, 0)),
        compiler_params=pltpu.CompilerParams(
            dimension_semantics=("parallel", "parallel")),
    )(fine_v, sf, coarse_nhwc, sc)
    return out.reshape(N, H, W, C)


# ----------------------------------------------------------------------------
# Kernel D: fused SE-scale + nearest upsample (8x/4x/2x/1x) + channel concat.
# Writes the final fused NHWC tensor directly (lane-dense 4*(C/4) output).
# ----------------------------------------------------------------------------
def _fuse_kernel(p5_ref, p4_ref, p3_ref, p2_ref, s_ref,
                 r8_ref, r4_ref, r2_ref, r1_ref, o_ref):
    def level_rep(p_ref, r_ref, idx, rc):
        s = s_ref[0, idx:idx + 1, :]                               # (1, C4) f32
        src = p_ref[0, rc].astype(jnp.float32) * s                 # (Wp_l, C4)
        # W-replication (and padded-column selection) via a constant 0/1 matmul.
        return jnp.dot(r_ref[...], src, preferred_element_type=jnp.float32)  # (W2, C4)

    rep5 = level_rep(p5_ref, r8_ref, 0, 0)
    rep4 = [level_rep(p4_ref, r4_ref, 1, rc) for rc in range(2)]
    rep3 = [level_rep(p3_ref, r2_ref, 2, rc) for rc in range(4)]
    rep2 = [level_rep(p2_ref, r1_ref, 3, rc) for rc in range(8)]

    for r in range(8):   # 8 fine output rows per grid step; H-replication is indexing.
        row = jnp.concatenate([rep5, rep4[r // 4], rep3[r // 2], rep2[r]], axis=-1)
        o_ref[0, r] = row.astype(o_ref.dtype)


def fuse_upsample_concat(p_flat_list, scales, dims, *, out_dtype):
    """p_flat_list: [p5,p4,p3,p2] conv outputs (pre SE scale) in padded-column
    layout (N, H_l*(W_l+2), C4).  scales: (N,4,C4) f32.  dims: [(H5,W5),...,(H2,W2)].
    Returns fused NHWC tensor (N, H2, W2, 4*C4)."""
    N = p_flat_list[0].shape[0]
    c4 = p_flat_list[0].shape[-1]
    (_, _), (_, _), (_, _), (H2, W2) = dims
    assert H2 % 8 == 0, "c2-level height must be divisible by 8"

    factors = (8, 4, 2, 1)
    rows_per = (1, 2, 4, 8)
    p_views, r_mats, in_specs = [], [], []
    for p, (Hl, Wl), f in zip(p_flat_list, dims, factors):
        Wpl = Wl + 2
        p_views.append(p.reshape(N, Hl, Wpl, c4))
        w_out = jnp.arange(W2) // f + 1                         # padded source column
        r_mats.append((w_out[:, None] == jnp.arange(Wpl)[None, :]).astype(jnp.float32))
    for pv, rp in zip(p_views, rows_per):
        in_specs.append(pl.BlockSpec((1, rp, pv.shape[2], c4), lambda n, i: (n, i, 0, 0)))
    in_specs.append(pl.BlockSpec((1, 4, c4), lambda n, i: (n, 0, 0)))
    for rm in r_mats:
        in_specs.append(pl.BlockSpec(rm.shape, lambda n, i: (0, 0)))

    return pl.pallas_call(
        _fuse_kernel,
        out_shape=jax.ShapeDtypeStruct((N, H2, W2, 4 * c4), out_dtype),
        grid=(N, H2 // 8),
        in_specs=in_specs,
        out_specs=pl.BlockSpec((1, 8, W2, 4 * c4), lambda n, i: (n, i, 0, 0)),
        compiler_params=pltpu.CompilerParams(
            dimension_semantics=("parallel", "parallel")),
    )(*p_views, scales, *r_mats)


# ----------------------------------------------------------------------------
# SE squeeze/excite FC (per image, C x C/4 -- negligible, plain JAX glue).
# ----------------------------------------------------------------------------
def _se_scale(sums, hw, se, shortcut):
    pooled = sums[:, 0, :].astype(jnp.float32) / float(hw)           # (N, C)
    h = jnp.maximum(pooled @ se["w1"] + se["b1"], 0.0)
    s = jnp.clip((h @ se["w2"] + se["b2"]) / 6.0 + 0.5, 0.0, 1.0)    # torch hardsigmoid
    if shortcut:
        s = s + 1.0                                                  # fold residual into scale
    return s[:, None, :]                                             # (N, 1, C)


# ----------------------------------------------------------------------------
# Parameters (synthetic, deterministic)
# ----------------------------------------------------------------------------
def init_rsefpn_params(key, in_channels, out_channels):
    assert out_channels % 4 == 0
    cq = out_channels // 4

    def se_params(k, c):
        cr = max(c // 4, 1)
        k1, k2, k3, k4 = jax.random.split(k, 4)
        return dict(
            w1=0.2 * jax.random.normal(k1, (c, cr), jnp.float32),
            b1=0.1 * jax.random.normal(k2, (cr,), jnp.float32),
            w2=0.2 * jax.random.normal(k3, (cr, c), jnp.float32),
            b2=0.1 * jax.random.normal(k4, (c,), jnp.float32),
        )

    params = {"out_channels": out_channels, "ins": [], "inp": []}
    keys = jax.random.split(key, 4 * len(in_channels))
    for i, cin in enumerate(in_channels):
        k_w1, k_se1, k_w3, k_se3 = keys[4 * i: 4 * i + 4]
        # 1x1 conv weight as (Cin, Cout); 3x3 as (9, Cin, Cout) with ky-major taps.
        params["ins"].append(dict(
            w=0.1 * jax.random.normal(k_w1, (cin, out_channels), jnp.float32),
            se=se_params(k_se1, out_channels)))
        params["inp"].append(dict(
            w=0.1 * jax.random.normal(k_w3, (9, out_channels, cq), jnp.float32),
            se=se_params(k_se3, cq)))
    return params


# ----------------------------------------------------------------------------
# RSEFPN forward
# ----------------------------------------------------------------------------
def rsefpn_forward(x_nchw_list, params, shortcut=True,
                   compute_dtype=jnp.bfloat16, out_dtype=jnp.float32):
    """x_nchw_list: [c2, c3, c4, c5] in NCHW.  Returns fused feature map (NCHW)."""
    C = params["out_channels"]
    feats = [jnp.transpose(x, (0, 2, 3, 1)).astype(compute_dtype) for x in x_nchw_list]
    N = feats[0].shape[0]
    dims = [f.shape[1:3] for f in feats]                 # [(H2,W2),(H3,W3),(H4,W4),(H5,W5)]

    # ---- ins (1x1 conv + channel sums); SE scale computed once per image ----
    ys, scales_in = [], []
    for lvl in range(4):
        H, W = dims[lvl]
        x_flat = feats[lvl].reshape(N, H * W, feats[lvl].shape[-1])
        w = params["ins"][lvl]["w"].astype(compute_dtype)
        y, sums = conv1x1_with_sums(x_flat, w, y_dtype=compute_dtype)
        ys.append(y)                                                    # unscaled conv out
        scales_in.append(_se_scale(sums, H * W, params["ins"][lvl]["se"], shortcut))

    ones_scale = jnp.ones((N, 1, C), jnp.float32)
    (H2, W2), (H3, W3), (H4, W4), (H5, W5) = dims
    in5_coarse = ys[3].reshape(N, H5, W5, C)

    # ---- top-down merges: fused SE-scale + 2x nearest upsample + add ----
    out4 = merge_upsample_add(ys[2], scales_in[2], in5_coarse, scales_in[3],
                              H4, W4, C, out_dtype=compute_dtype)
    out3 = merge_upsample_add(ys[1], scales_in[1], out4, ones_scale,
                              H3, W3, C, out_dtype=compute_dtype)
    out2 = merge_upsample_add(ys[0], scales_in[0], out3, ones_scale,
                              H2, W2, C, out_dtype=compute_dtype)

    # ---- inp (3x3 conv + channel sums); in5's SE scale folded into the conv input ----
    inp_inputs = [(in5_coarse, scales_in[3]), (out4, ones_scale),
                  (out3, ones_scale), (out2, ones_scale)]
    inp_dims = [(H5, W5), (H4, W4), (H3, W3), (H2, W2)]
    p_ys, p_scales = [], []
    for k, (x_nhwc, in_scale) in enumerate(inp_inputs):
        lvl = 3 - k                                     # inp_conv[3] -> p5, ... inp_conv[0] -> p2
        w9 = params["inp"][lvl]["w"].astype(compute_dtype)
        y, sums = conv3x3_with_sums(x_nhwc, in_scale, w9, y_dtype=compute_dtype)
        H, W = inp_dims[k]
        p_ys.append(y)
        p_scales.append(_se_scale(sums, H * W, params["inp"][lvl]["se"], shortcut))

    # ---- final fused SE-scale + upsample(8/4/2/1) + channel concat ----
    scales = jnp.concatenate(p_scales, axis=1)          # (N, 4, C/4), order p5,p4,p3,p2
    fuse_nhwc = fuse_upsample_concat(p_ys, scales, inp_dims, out_dtype=out_dtype)

    # TODO(synk): skip this transpose if the consumer can accept NHWC directly.
    return jnp.transpose(fuse_nhwc, (0, 3, 1, 2))


# ----------------------------------------------------------------------------
# Independent XLA reference (for correctness check of the f32 run)
# ----------------------------------------------------------------------------
def _conv_ref(x, w_mat, ksize):
    if ksize == 1:
        w = w_mat[None, None, :, :]
    else:
        w = w_mat.reshape(3, 3, w_mat.shape[1], w_mat.shape[2])
    return lax.conv_general_dilated(x, w, (1, 1), "SAME",
                                    dimension_numbers=("NHWC", "HWIO", "NHWC"),
                                    precision=lax.Precision.HIGHEST)


def _rse_layer_ref(x, p, ksize, shortcut):
    y = _conv_ref(x, p["w"], ksize)
    pooled = jnp.mean(y, axis=(1, 2))
    h = jnp.maximum(pooled @ p["se"]["w1"] + p["se"]["b1"], 0.0)
    s = jnp.clip((h @ p["se"]["w2"] + p["se"]["b2"]) / 6.0 + 0.5, 0.0, 1.0)
    s = s[:, None, None, :]
    return y + y * s if shortcut else y * s


def _up_ref(x, f):
    return jnp.repeat(jnp.repeat(x, f, axis=1), f, axis=2)


def rsefpn_reference(x_nchw_list, params, shortcut=True):
    c2, c3, c4, c5 = [jnp.transpose(x, (0, 2, 3, 1)) for x in x_nchw_list]
    in5 = _rse_layer_ref(c5, params["ins"][3], 1, shortcut)
    in4 = _rse_layer_ref(c4, params["ins"][2], 1, shortcut)
    in3 = _rse_layer_ref(c3, params["ins"][1], 1, shortcut)
    in2 = _rse_layer_ref(c2, params["ins"][0], 1, shortcut)
    out4 = in4 + _up_ref(in5, 2)
    out3 = in3 + _up_ref(out4, 2)
    out2 = in2 + _up_ref(out3, 2)
    p5 = _rse_layer_ref(in5, params["inp"][3], 3, shortcut)
    p4 = _rse_layer_ref(out4, params["inp"][2], 3, shortcut)
    p3 = _rse_layer_ref(out3, params["inp"][1], 3, shortcut)
    p2 = _rse_layer_ref(out2, params["inp"][0], 3, shortcut)
    fuse = jnp.concatenate([_up_ref(p5, 8), _up_ref(p4, 4), _up_ref(p3, 2), p2], axis=-1)
    return jnp.transpose(fuse, (0, 3, 1, 2))


# ----------------------------------------------------------------------------
# Demo
# ----------------------------------------------------------------------------
if __name__ == "__main__":
    key = jax.random.PRNGKey(0)
    k_in, k_par = jax.random.split(key)

    # Small synthetic FPN pyramid (NCHW): c2..c5, spatial /2 per level.
    in_channels = [8, 16, 24, 32]
    out_channels = 32
    N = 2
    spatial = [16, 8, 4, 2]

    ks = jax.random.split(k_in, 4)
    xs = [jax.random.normal(ks[i], (N, in_channels[i], spatial[i], spatial[i]), jnp.float32)
          for i in range(4)]
    params = init_rsefpn_params(k_par, in_channels, out_channels)
    expected_shape = (N, out_channels, spatial[0], spatial[0])

    # f32 run, checked against an independent XLA reference implementation.
    fuse32 = jax.block_until_ready(
        rsefpn_forward(xs, params, shortcut=True, compute_dtype=jnp.float32))
    ref = jax.block_until_ready(rsefpn_reference(xs, params, shortcut=True))
    assert fuse32.shape == expected_shape, (fuse32.shape, expected_shape)
    err = float(jnp.max(jnp.abs(fuse32 - ref)))
    assert err < 2e-2, f"max abs error vs reference too large: {err}"

    # bf16 run (the bandwidth-optimized configuration for v6e/v7x).
    fuse_bf16 = jax.block_until_ready(
        rsefpn_forward(xs, params, shortcut=True, compute_dtype=jnp.bfloat16))
    assert fuse_bf16.shape == expected_shape
    assert bool(jnp.all(jnp.isfinite(fuse_bf16)))

    print("KERNEL_OK")
</pallas_src>

<mosaic_0001>
module attributes {stable_mosaic.version = 11 : i64} {
  func.func @_conv1x1_sum_kernel(%arg0: i32, %arg1: i32, %arg2: memref<1x256x8xf32, #tpu.memory_space<vmem>>, %arg3: memref<8x32xf32, #tpu.memory_space<vmem>>, %arg4: memref<1x256x32xf32, #tpu.memory_space<vmem>>, %arg5: memref<1x1x32xf32, #tpu.memory_space<vmem>>) attributes {dimension_semantics = [#tpu.dimension_semantics<parallel>, #tpu.dimension_semantics<arbitrary>], iteration_bounds = array<i64: 2, 1>, scalar_prefetch = 0 : i64, scratch_operands = 0 : i64, tpu.core_type = #tpu.core_type<tc>, window_params = [{transform_indices = @transform_0, window_bounds = array<i64: 1, 256, 8>}, {pipeline_mode = #tpu.pipeline_mode<synchronous>, transform_indices = @transform_1, window_bounds = array<i64: 8, 32>}, {transform_indices = @transform_2, window_bounds = array<i64: 1, 256, 32>}, {transform_indices = @transform_3, window_bounds = array<i64: 1, 1, 32>}]} {
    %c0 = arith.constant 0 : index
    %c0_0 = arith.constant 0 : index
    %c0_1 = arith.constant 0 : index
    %0 = vector.load %arg2[%c0, %c0_0, %c0_1] : memref<1x256x8xf32, #tpu.memory_space<vmem>>, vector<1x256x8xf32>
    %1 = vector.shape_cast %0 : vector<1x256x8xf32> to vector<256x8xf32>
    %c0_2 = arith.constant 0 : index
    %c0_3 = arith.constant 0 : index
    %2 = vector.load %arg3[%c0_2, %c0_3] : memref<8x32xf32, #tpu.memory_space<vmem>>, vector<8x32xf32>
    %cst = arith.constant dense<0.000000e+00> : vector<256x32xf32>
    %3 = tpu.matmul %1, %2, %cst {dimension_numbers = #tpu.dot_dimension_numbers<[1], [0], [0], [1], [0, 0, 1, 1], [], []>} : vector<256x8xf32>, vector<8x32xf32>, vector<256x32xf32> -> vector<256x32xf32>
    %c0_i32 = arith.constant 0 : i32
    %4 = arith.cmpi eq, %arg1, %c0_i32 : i32
    %5 = arith.extui %4 : i1 to i32
    %c0_i32_4 = arith.constant 0 : i32
    %6 = arith.cmpi ne, %5, %c0_i32_4 : i32
    scf.if %6 {
      %cst_15 = arith.constant 0.000000e+00 : f32
      %16 = vector.broadcast %cst_15 : f32 to vector<1x1x32xf32>
      %c0_16 = arith.constant 0 : index
      %c0_17 = arith.constant 0 : index
      %c0_18 = arith.constant 0 : index
      %17 = vector.load %arg5[%c0_16, %c0_17, %c0_18] : memref<1x1x32xf32, #tpu.memory_space<vmem>>, vector<1x1x32xf32>
      tpu.vector_store %arg5[%c0_16, %c0_17, %c0_18], %16 {strides = array<i32>} : memref<1x1x32xf32, #tpu.memory_space<vmem>>, vector<1x1x32xf32>,
    } else {
    }
    %c0_5 = arith.constant 0 : index
    %c0_6 = arith.constant 0 : index
    %c0_7 = arith.constant 0 : index
    %7 = vector.load %arg5[%c0_5, %c0_6, %c0_7] : memref<1x1x32xf32, #tpu.memory_space<vmem>>, vector<1x1x32xf32>
    %cst_8 = arith.constant dense<0.000000e+00> : vector<32xf32>
    %8 = vector.multi_reduction <add>, %3, %cst_8 [0] : vector<256x32xf32> to vector<32xf32>
    %9 = vector.shape_cast %8 : vector<32xf32> to vector<1x32xf32>
    %10 = vector.shape_cast %9 : vector<1x32xf32> to vector<1x1x32xf32>
    %11 = arith.addf %7, %10 : vector<1x1x32xf32>
    %c0_9 = arith.constant 0 : index
    %c0_10 = arith.constant 0 : index
    %c0_11 = arith.constant 0 : index
    %12 = vector.load %arg5[%c0_9, %c0_10, %c0_11] : memref<1x1x32xf32, #tpu.memory_space<vmem>>, vector<1x1x32xf32>
    tpu.vector_store %arg5[%c0_9, %c0_10, %c0_11], %11 {strides = array<i32>} : memref<1x1x32xf32, #tpu.memory_space<vmem>>, vector<1x1x32xf32>,
    %c0_12 = arith.constant 0 : index
    %c0_13 = arith.constant 0 : index
    %c0_14 = arith.constant 0 : index
    %13 = vector.load %arg4[%c0_12, %c0_13, %c0_14] : memref<1x256x32xf32, #tpu.memory_space<vmem>>, vector<1x256x32xf32>
    %14 = vector.shape_cast %13 : vector<1x256x32xf32> to vector<256x32xf32>
    %15 = vector.shape_cast %3 : vector<256x32xf32> to vector<1x256x32xf32>
    tpu.vector_store %arg4[%c0_12, %c0_13, %c0_14], %15 {strides = array<i32>} : memref<1x256x32xf32, #tpu.memory_space<vmem>>, vector<1x256x32xf32>,
    return
  }
  func.func @transform_0(%arg0: i32, %arg1: i32) -> (i32, i32, i32) {
    %c0_i32 = arith.constant 0 : i32
    %c0_i32_0 = arith.constant 0 : i32
    return %arg0, %arg1, %c0_i32 : i32, i32, i32
  }
  func.func @transform_1(%arg0: i32, %arg1: i32) -> (i32, i32) {
    %c0_i32 = arith.constant 0 : i32
    %c0_i32_0 = arith.constant 0 : i32
    %c0_i32_1 = arith.constant 0 : i32
    return %c0_i32, %c0_i32_0 : i32, i32
  }
  func.func @transform_2(%arg0: i32, %arg1: i32) -> (i32, i32, i32) {
    %c0_i32 = arith.constant 0 : i32
    %c0_i32_0 = arith.constant 0 : i32
    return %arg0, %arg1, %c0_i32 : i32, i32, i32
  }
  func.func @transform_3(%arg0: i32, %arg1: i32) -> (i32, i32, i32) {
    %c0_i32 = arith.constant 0 : i32
    %c0_i32_0 = arith.constant 0 : i32
    %c0_i32_1 = arith.constant 0 : i32
    return %arg0, %c0_i32, %c0_i32_0 : i32, i32, i32
  }
}

</mosaic_0001>

<llo_original>
// kernel: tpu_custom_call.1
$region0: #{tpu_custom_call.1}
  #allocation0 [shape = 'u32[]', space=smem, size = 0x4, offset = 0x4, fixed_abs, tag = 'smem constant byte address 0x4 - core index']
  #allocation1 [shape = 'u32[144,128]{1,0:T(1,128)}', space=vmem, size = 0x12000, scoped, tag = 'internal scratch']
  %s0 = inlined_call_operand.vmem [shape: f32[2,256,8], index: 0, kind: input, shape index: {}]
  %s1 = inlined_call_operand.vmem [shape: f32[8,32], index: 1, kind: input, shape index: {}]
  %s2 = inlined_call_operand.vmem [shape: f32[2,256,32], index: 2, kind: output, shape index: {0}]
  %s3 = inlined_call_operand.hbm [shape: f32[2,1,32], index: 3, kind: output, shape index: {1}]
  %4 = xla_tuple %s2, %s3
  %s5 = sld [smem:[#allocation0]]
  $region53: #{tpu_custom_call.1} parent=0
    _
  %s7 = ssub.s32 1, %s5
  %s8 = scalar_select 0, %s7, %s5
  $region1: #{tpu_custom_call.1} parent=0
    #allocation2 [shape = 'u8[1024]{0}', space=vmem, size = 0x400, scoped, tag = 'output window, operand 1']
    #allocation3 [shape = 's32[2]{0}', space=sflag, size = 0x8, scoped, tag = 'scoped memory for tpu_custom_call.1']
    %9 = vsyncpa [#allocation3], 0
    %s10 = scalar_lea.sflag [#allocation3], 1
    %11 = vsyncpa %s10, 0
    loop: start=0, step=1, limit=4
    $region2: #{tpu_custom_call.1} parent=1 // loop_pre_header
      _
    $region3: #{tpu_custom_call.1} parent=1 // loop_header
      %s13 = sphi 0, %s17
      %p14 = scmp.ge.s32.totalorder %s13, 4
      %s20 = sphi 0, %s32
      %s21 = sphi 0, %s28
      %s22 = sphi 0, %s20
      %s23 = sphi 0, %s21
      %s24 = sphi 0, %s22
      %s25 = sphi 0, %s23
      %s37 = sphi 0, %s39
      %s40 = sphi 0, %s37
      %s41 = sphi 0, %s40
      %s57 = sphi 0, %s41
      %s61 = sphi 0, %s61
      %s63 = sphi 0, %s61
      %s64 = sphi 0, %s63
      %s78 = sphi 0, %s64
      %s86 = sphi 0, %s88
      %s89 = sphi 0, %s86
      %s90 = sphi 0, %s89
      %s106 = sphi 0, %s90
      %s112 = sphi 0, %s114
      %s115 = sphi 0, %s112
      %s116 = sphi 0, %s115
      %s132 = sphi 0, %s116
    $region4: #{tpu_custom_call.1} parent=1 // loop_header_branch
      %16 = sbr.rel (%p14) target = $region8
    $region5: #{tpu_custom_call.1} parent=1 // loop_body
      %s18 = ssub.s32 %s13, 1
      %s19 = ssub.s32 %s13, 2
      %s26 = sadd.s32 1, %s21
      %p27 = scmp.ge.s32.totalorder %s26, 1
      %s28 = scalar_select %p27, 0, %s26
      %s29 = sadd.s32 1, %s20
      %s30 = scalar_select %p27, %s29, %s20
      %p31 = scmp.ge.s32.totalorder %s30, 2
      %s32 = scalar_select %p31, 0, %s30
      %s33 = ssub.s32 %s20, %s32
      %s34 = ssub.s32 %s21, %s28
      %s35 = sor.u32 %s33, %s34
      %p36 = scmp.eq.s32.totalorder %s35, 0
      %s38 = sadd.s32 %s37, 1
      %s39 = scalar_select %p36, %s37, %s38
      %p42 = pneg %p36
      %p43 = scmp.eq.s32.totalorder %s13, 1
      %p44 = por %p42, %p43
      %p45 = scmp.ne.s32.totalorder %s37, %s40
      %p46 = scmp.eq.s32.totalorder %s13, 0
      %p47 = por %p45, %p46
      %p48 = scmp.ne.s32.totalorder %s37, %s40
      %p49 = scmp.eq.s32.totalorder %s18, 1
      %p50 = por %p48, %p49
      %p51 = scmp.ne.s32.totalorder %s40, %s41
      %p52 = scmp.eq.s32.totalorder %s18, 0
      %p53 = por %p51, %p52
      %p54 = scmp.ne.s32.totalorder %s40, %s41
      %p55 = scmp.eq.s32.totalorder %s19, 1
      %p56 = por %p54, %p55
      %p58 = scmp.ne.s32.totalorder %s41, %s57
      %p59 = scmp.eq.s32.totalorder %s19, 0
      %p60 = por %p58, %p59
      %s62 = sadd.s32 %s61, 1
      %p65 = scmp.eq.s32.totalorder %s13, 1
      %p66 = scmp.ne.s32.totalorder %s61, %s63
      %p67 = scmp.eq.s32.totalorder %s13, 0
      %p68 = por %p66, %p67
      %p69 = scmp.ne.s32.totalorder %s61, %s63
      %p70 = scmp.eq.s32.totalorder %s18, 1
      %p71 = por %p69, %p70
      %p72 = scmp.ne.s32.totalorder %s63, %s64
      %p73 = scmp.eq.s32.totalorder %s18, 0
      %p74 = por %p72, %p73
      %p75 = scmp.ne.s32.totalorder %s63, %s64
      %p76 = scmp.eq.s32.totalorder %s19, 1
      %p77 = por %p75, %p76
      %p79 = scmp.ne.s32.totalorder %s64, %s78
      %p80 = scmp.eq.s32.totalorder %s19, 0
      %p81 = por %p79, %p80
      %s82 = ssub.s32 %s20, %s32
      %s83 = ssub.s32 %s21, %s28
      %s84 = sor.u32 %s82, %s83
      %p85 = scmp.eq.s32.totalorder %s84, 0
      %s87 = sadd.s32 %s86, 1
      %s88 = scalar_select %p85, %s86, %s87
      %p91 = pneg %p85
      %p92 = scmp.eq.s32.totalorder %s13, 1
      %p93 = por %p91, %p92
      %p94 = scmp.ne.s32.totalorder %s86, %s89
      %p95 = scmp.eq.s32.totalorder %s13, 0
      %p96 = por %p94, %p95
      %p97 = scmp.ne.s32.totalorder %s86, %s89
      %p98 = scmp.eq.s32.totalorder %s18, 1
      %p99 = por %p97, %p98
      %p100 = scmp.ne.s32.totalorder %s89, %s90
      %p101 = scmp.eq.s32.totalorder %s18, 0
      %p102 = por %p100, %p101
      %p103 = scmp.ne.s32.totalorder %s89, %s90
      %p104 = scmp.eq.s32.totalorder %s19, 1
      %p105 = por %p103, %p104
      %p107 = scmp.ne.s32.totalorder %s90, %s106
      %p108 = scmp.eq.s32.totalorder %s19, 0
      %p109 = por %p107, %p108
      %s110 = ssub.s32 %s20, %s32
      %p111 = scmp.eq.s32.totalorder %s110, 0
      %s113 = sadd.s32 %s112, 1
      %s114 = scalar_select %p111, %s112, %s113
      %p117 = pneg %p111
      %p118 = scmp.eq.s32.totalorder %s13, 1
      %p119 = por %p117, %p118
      %p120 = scmp.ne.s32.totalorder %s112, %s115
      %p121 = scmp.eq.s32.totalorder %s13, 0
      %p122 = por %p120, %p121
      %p123 = scmp.ne.s32.totalorder %s112, %s115
      %p124 = scmp.eq.s32.totalorder %s18, 1
      %p125 = por %p123, %p124
      %p126 = scmp.ne.s32.totalorder %s115, %s116
      %p127 = scmp.eq.s32.totalorder %s18, 0
      %p128 = por %p126, %p127
      %p129 = scmp.ne.s32.totalorder %s115, %s116
      %p130 = scmp.eq.s32.totalorder %s19, 1
      %p131 = por %p129, %p130
      %p133 = scmp.ne.s32.totalorder %s116, %s132
      %p134 = scmp.eq.s32.totalorder %s19, 0
      %p135 = por %p133, %p134
      %p136 = scmp.le.s32.totalorder 1, %s13
      %p137 = scmp.lt.s32.totalorder %s13, 3
      %p138 = pnand %p136, %p137
      %p139 = pneg %p138
      // Predicated region
      $region9: #{tpu_custom_call.1} parent=5 // pred_check
        _
      $region10: #{tpu_custom_call.1} parent=5 // pred_check_branch
        %141 = sbr.rel (%p138) target = $region12
      $region11: #{tpu_custom_call.1} parent=5 // pred_region
        %s142 = ssub.s32 %s13, 1
        // Predicated region
        $region13: #{tpu_custom_call.1} parent=11 // pred_check
          %p143 = pneg %p74
        $region14: #{tpu_custom_call.1} parent=11 // pred_check_branch
          %145 = sbr.rel (%p143) target = $region16
        $region15: #{tpu_custom_call.1} parent=11 // pred_region
          _
        $region16: #{tpu_custom_call.1} parent=11 // pred_fallthru
          _
      $region12: #{tpu_custom_call.1} parent=5 // pred_fallthru
        _
      %p146 = scmp.lt.s32.totalorder %s13, 2
      // Predicated region
      $region17: #{tpu_custom_call.1} parent=5 // pred_check
        %p147 = pneg %p146
      $region18: #{tpu_custom_call.1} parent=5 // pred_check_branch
        %149 = sbr.rel (%p147) target = $region20
      $region19: #{tpu_custom_call.1} parent=5 // pred_region
        // Predicated region
        $region21: #{tpu_custom_call.1} parent=19 // pred_check
          %p150 = pneg %p47
        $region22: #{tpu_custom_call.1} parent=19 // pred_check_branch
          %152 = sbr.rel (%p150) target = $region24
        $region23: #{tpu_custom_call.1} parent=19 // pred_region
          %s153 = smul.u32 32, %s21
          %p154 = scmp.lt.s32.totalorder %s20, 1
          %s155 = scalar_select %p154, %s20, 1
          %p156 = scmp.lt.s32.totalorder %s153, 31
          %s157 = scalar_select %p156, %s153, 31
          %s158 = smul.addr %s155, 32
          %s159 = sadd.s32 %s157, %s158
          %s160 = smul.addr %s159, 8
          %s161 = scalar_lea.vmem %s0, %s160
          %s162 = smul.u32 32, %s21
        $region24: #{tpu_custom_call.1} parent=19 // pred_fallthru
          _
      $region20: #{tpu_custom_call.1} parent=5 // pred_fallthru
        _
      %p163 = scmp.le.s32.totalorder 1, %s13
      %p164 = scmp.lt.s32.totalorder %s13, 3
      %p165 = pnand %p163, %p164
      %p166 = pneg %p165
      // Predicated region
      $region25: #{tpu_custom_call.1} parent=5 // pred_check
        _
      $region26: #{tpu_custom_call.1} parent=5 // pred_check_branch
        %168 = sbr.rel (%p165) target = $region28
      $region27: #{tpu_custom_call.1} parent=5 // pred_region
        %s169 = ssub.s32 %s13, 1
        %s170 = smul.u32 32, %s23
        %p171 = scmp.lt.s32.totalorder %s22, 1
        %s172 = scalar_select %p171, %s22, 1
        %p173 = scmp.lt.s32.totalorder %s170, 31
        %s174 = scalar_select %p173, %s170, 31
        %s175 = smul.addr %s172, 32
        %s176 = sadd.s32 %s174, %s175
        %s177 = smul.addr %s176, 8
        %s178 = scalar_lea.vmem %s0, %s177
        %p179 = pneg %p53
        %p180 = pneg %p50
        %p181 = pneg %p74
        %p182 = pneg %p71
        %p183 = pneg %p102
        %p184 = pneg %p99
        %s185 = smul.u32 32, %s23
        %p186 = scmp.lt.s32.totalorder %s22, 1
        %s187 = scalar_select %p186, %s22, 1
        %p188 = scmp.lt.s32.totalorder %s185, 31
        %s189 = scalar_select %p188, %s185, 31
        %s190 = smul.addr %s187, 32
        %s191 = sadd.s32 %s189, %s190
        %s192 = smul.addr %s191, 8
        %s193 = scalar_lea.vmem %s2, %s192
        %p194 = pneg %p128
        %p195 = pneg %p125
        %s196 = sand.u32 %s115, 1
        %s197 = scalar_lea.sflag [#allocation3], %s196
        %s198 = sand.u32 %s115, 1
        %s199 = scalar_lea.vmem [#allocation2], %s198
        %s200 = smul.u32 32, %s23
        %p201 = scmp.lt.s32.totalorder %s22, 1
        %s202 = scalar_select %p201, %s22, 1
        %p203 = scmp.lt.s32.totalorder %s200, 31
        %s204 = scalar_select %p203, %s200, 31
        %s205 = smul.addr %s202, 32
        %s206 = sadd.s32 %s204, %s205
        %s207 = smul.addr %s206, 8
        %s208 = scalar_lea.vmem %s0, %s207
        %s209 = smul.u32 32, %s23
        %s210 = smul.u32 32, %s23
        %p211 = scmp.lt.s32.totalorder %s22, 1
        %s212 = scalar_select %p211, %s22, 1
        %p213 = scmp.lt.s32.totalorder %s210, 31
        %s214 = scalar_select %p213, %s210, 31
        %s215 = smul.addr %s212, 32
        %s216 = sadd.s32 %s214, %s215
        %s217 = smul.addr %s216, 8
        %s218 = scalar_lea.vmem %s2, %s217
        %s219 = smul.u32 32, %s23
        %v220 = vld [vmem:[%s208] sm:$0xff]
        %v221 = vld [vmem:[%s208 + $0x8] sm:$0xff]
        %v222 = vld [vmem:[%s208 + $0x10] sm:$0xff]
        %v223 = vld [vmem:[%s208 + $0x18] sm:$0xff]
        %v224 = vld [vmem:[%s208 + $0x20] sm:$0xff]
        %v225 = vld [vmem:[%s208 + $0x28] sm:$0xff]
        %v226 = vld [vmem:[%s208 + $0x30] sm:$0xff]
        %v227 = vld [vmem:[%s208 + $0x38] sm:$0xff]
        %v228 = vld [vmem:[%s208 + $0x40] sm:$0xff]
        %v229 = vld [vmem:[%s208 + $0x48] sm:$0xff]
        %v230 = vld [vmem:[%s208 + $0x50] sm:$0xff]
        %v231 = vld [vmem:[%s208 + $0x58] sm:$0xff]
        %v232 = vld [vmem:[%s208 + $0x60] sm:$0xff]
        %v233 = vld [vmem:[%s208 + $0x68] sm:$0xff]
        %v234 = vld [vmem:[%s208 + $0x70] sm:$0xff]
        %v235 = vld [vmem:[%s208 + $0x78] sm:$0xff]
        %v236 = vld [vmem:[%s208 + $0x80] sm:$0xff]
        %v237 = vld [vmem:[%s208 + $0x88] sm:$0xff]
        %v238 = vld [vmem:[%s208 + $0x90] sm:$0xff]
        %v239 = vld [vmem:[%s208 + $0x98] sm:$0xff]
        %v240 = vld [vmem:[%s208 + $0xa0] sm:$0xff]
        %v241 = vld [vmem:[%s208 + $0xa8] sm:$0xff]
        %v242 = vld [vmem:[%s208 + $0xb0] sm:$0xff]
        %v243 = vld [vmem:[%s208 + $0xb8] sm:$0xff]
        %v244 = vld [vmem:[%s208 + $0xc0] sm:$0xff]
        %v245 = vld [vmem:[%s208 + $0xc8] sm:$0xff]
        %v246 = vld [vmem:[%s208 + $0xd0] sm:$0xff]
        %v247 = vld [vmem:[%s208 + $0xd8] sm:$0xff]
        %v248 = vld [vmem:[%s208 + $0xe0] sm:$0xff]
        %v249 = vld [vmem:[%s208 + $0xe8] sm:$0xff]
        %v250 = vld [vmem:[%s208 + $0xf0] sm:$0xff]
        %v251 = vld [vmem:[%s208 + $0xf8] sm:$0xff]
        %v252 = vld [vmem:[%s1] sm:$0xff]
        %vm253 = vcmask 64512
        %v255 = vsel %vm253, %v220, 0
        %v258 = vsel %vm253, %v221, 0
        %v261 = vsel %vm253, %v222, 0
        %v264 = vsel %vm253, %v223, 0
        %v267 = vsel %vm253, %v224, 0
        %v270 = vsel %vm253, %v225, 0
        %v273 = vsel %vm253, %v226, 0
        %v276 = vsel %vm253, %v227, 0
        %v279 = vsel %vm253, %v228, 0
        %v282 = vsel %vm253, %v229, 0
        %v285 = vsel %vm253, %v230, 0
        %v288 = vsel %vm253, %v231, 0
        %v291 = vsel %vm253, %v232, 0
        %v294 = vsel %vm253, %v233, 0
        %v297 = vsel %vm253, %v234, 0
        %v300 = vsel %vm253, %v235, 0
        %v303 = vsel %vm253, %v236, 0
        %v306 = vsel %vm253, %v237, 0
        %v309 = vsel %vm253, %v238, 0
        %v312 = vsel %vm253, %v239, 0
        %v315 = vsel %vm253, %v240, 0
        %v318 = vsel %vm253, %v241, 0
        %v321 = vsel %vm253, %v242, 0
        %v324 = vsel %vm253, %v243, 0
        %v327 = vsel %vm253, %v244, 0
        %v330 = vsel %vm253, %v245, 0
        %v333 = vsel %vm253, %v246, 0
        %v336 = vsel %vm253, %v247, 0
        %v339 = vsel %vm253, %v248, 0
        %v342 = vsel %vm253, %v249, 0
        %v345 = vsel %vm253, %v250, 0
        %v348 = vsel %vm253, %v251, 0
        %350 = vmatprep.subr.mxu0 0.0
        %351 = vmatpush1.msra.mxu0 %v252
        %352 = vmatprep.subr.mxu0 0.0
        %353 = vmatpush1.msra.mxu0 0.0
        %354 = vmatprep.subr.mxu0 0.0
        %355 = vmatpush1.msra.mxu0 0.0
        %356 = vmatprep.subr.mxu0 0.0
        %357 = vmatpush1.msra.mxu0 0.0
        %358 = vmatprep.subr.mxu0 0.0
        %359 = vmatpush1.msra.mxu0 0.0
        %360 = vmatprep.subr.mxu0 0.0
        %361 = vmatpush1.msra.mxu0 0.0
        %362 = vmatprep.subr.mxu0 0.0
        %363 = vmatpush1.msra.mxu0 0.0
        %364 = vmatprep.subr.mxu0 0.0
        %365 = vmatpush1.msra.mxu0 0.0
        %366 = vmatprep.subr.mxu0 0.0
        %367 = vmatpush1.msra.mxu0 0.0
        %368 = vmatprep.subr.mxu0 0.0
        %369 = vmatpush1.msra.mxu0 0.0
        %370 = vmatprep.subr.mxu0 0.0
        %371 = vmatpush1.msra.mxu0 0.0
        %372 = vmatprep.subr.mxu0 0.0
        %373 = vmatpush1.msra.mxu0 0.0
        %374 = vmatprep.subr.mxu0 0.0
        %375 = vmatpush1.msra.mxu0 0.0
        %376 = vmatprep.subr.mxu0 0.0
        %377 = vmatpush1.msra.mxu0 0.0
        %378 = vmatprep.subr.mxu0 0.0
        %379 = vmatpush1.msra.mxu0 0.0
        %380 = vmatprep.subr.mxu0 0.0
        %381 = vmatpush1.msra.mxu0 0.0
        %382 = vmatprep.subr.mxu0 0.0
        %383 = vmatpush1.msra.mxu0 0.0
        %384 = vmatprep.subr.mxu0 0.0
        %385 = vmatpush1.msra.mxu0 0.0
        %386 = vmatprep.subr.mxu0 0.0
        %387 = vmatpush1.msra.mxu0 0.0
        %388 = vmatprep.subr.mxu0 0.0
        %389 = vmatpush1.msra.mxu0 0.0
        %390 = vmatprep.subr.mxu0 0.0
        %391 = vmatpush1.msra.mxu0 0.0
        %392 = vmatprep.subr.mxu0 0.0
        %393 = vmatpush1.msra.mxu0 0.0
        %394 = vmatprep.subr.mxu0 0.0
        %395 = vmatpush1.msra.mxu0 0.0
        %396 = vmatprep.subr.mxu0 0.0
        %397 = vmatpush1.msra.mxu0 0.0
        %398 = vmatprep.subr.mxu0 0.0
        %399 = vmatpush1.msra.mxu0 0.0
        %400 = vmatprep.subr.mxu0 0.0
        %401 = vmatpush1.msra.mxu0 0.0
        %402 = vmatprep.subr.mxu0 0.0
        %403 = vmatpush1.msra.mxu0 0.0
        %404 = vmatprep.subr.mxu0 0.0
        %405 = vmatpush1.msra.mxu0 0.0
        %406 = vmatprep.subr.mxu0 0.0
        %407 = vmatpush1.msra.mxu0 0.0
        %408 = vmatprep.subr.mxu0 0.0
        %409 = vmatpush1.msra.mxu0 0.0
        %410 = vmatprep.subr.mxu0 0.0
        %411 = vmatpush1.msra.mxu0 0.0
        %412 = vmatprep.subr.mxu0 0.0
        %413 = vmatpush1.msra.mxu0 0.0
        %414 = vmatprep.mubr.f32.mxu0 0.0
        %415 = vmatmul.mubr.f32.gmra.mrb[0].mxu0 %v255
        %v416 = vpop.f32.mrb[0].mxu0
        %v417 = vadd.f32 0.0, %v416
        %v418 = vpop.f32.mrb[0].mxu0
        %419 = vmatprep.mubr.f32.mxu0 0.0
        %420 = vmatmul.mubr.f32.gmra.mrb[0].mxu0 %v258
        %v421 = vpop.f32.mrb[0].mxu0
        %v422 = vadd.f32 0.0, %v421
        %v423 = vpop.f32.mrb[0].mxu0
        %424 = vmatprep.mubr.f32.mxu0 0.0
        %425 = vmatmul.mubr.f32.gmra.mrb[0].mxu0 %v261
        %v426 = vpop.f32.mrb[0].mxu0
        %v427 = vadd.f32 0.0, %v426
        %v428 = vpop.f32.mrb[0].mxu0
        %429 = vmatprep.mubr.f32.mxu0 0.0
        %430 = vmatmul.mubr.f32.gmra.mrb[0].mxu0 %v264
        %v431 = vpop.f32.mrb[0].mxu0
        %v432 = vadd.f32 0.0, %v431
        %v433 = vpop.f32.mrb[0].mxu0
        %434 = vmatprep.mubr.f32.mxu0 0.0
        %435 = vmatmul.mubr.f32.gmra.mrb[0].mxu0 %v267
        %v436 = vpop.f32.mrb[0].mxu0
        %v437 = vadd.f32 0.0, %v436
        %v438 = vpop.f32.mrb[0].mxu0
        %439 = vmatprep.mubr.f32.mxu0 0.0
        %440 = vmatmul.mubr.f32.gmra.mrb[0].mxu0 %v270
        %v441 = vpop.f32.mrb[0].mxu0
        %v442 = vadd.f32 0.0, %v441
        %v443 = vpop.f32.mrb[0].mxu0
        %444 = vmatprep.mubr.f32.mxu0 0.0
        %445 = vmatmul.mubr.f32.gmra.mrb[0].mxu0 %v273
        %v446 = vpop.f32.mrb[0].mxu0
        %v447 = vadd.f32 0.0, %v446
        %v448 = vpop.f32.mrb[0].mxu0
        %449 = vmatprep.mubr.f32.mxu0 0.0
        %450 = vmatmul.mubr.f32.gmra.mrb[0].mxu0 %v276
        %v451 = vpop.f32.mrb[0].mxu0
        %v452 = vadd.f32 0.0, %v451
        %v453 = vpop.f32.mrb[0].mxu0
        %454 = vmatprep.mubr.f32.mxu0 0.0
        %455 = vmatmul.mubr.f32.gmra.mrb[0].mxu0 %v279
        %v456 = vpop.f32.mrb[0].mxu0
        %v457 = vadd.f32 0.0, %v456
        %v458 = vpop.f32.mrb[0].mxu0
        %459 = vmatprep.mubr.f32.mxu0 0.0
        %460 = vmatmul.mubr.f32.gmra.mrb[0].mxu0 %v282
        %v461 = vpop.f32.mrb[0].mxu0
        %v462 = vadd.f32 0.0, %v461
        %v463 = vpop.f32.mrb[0].mxu0
        %464 = vmatprep.mubr.f32.mxu0 0.0
        %465 = vmatmul.mubr.f32.gmra.mrb[0].mxu0 %v285
        %v466 = vpop.f32.mrb[0].mxu0
        %v467 = vadd.f32 0.0, %v466
        %v468 = vpop.f32.mrb[0].mxu0
        %469 = vmatprep.mubr.f32.mxu0 0.0
        %470 = vmatmul.mubr.f32.gmra.mrb[0].mxu0 %v288
        %v471 = vpop.f32.mrb[0].mxu0
        %v472 = vadd.f32 0.0, %v471
        %v473 = vpop.f32.mrb[0].mxu0
        %474 = vmatprep.mubr.f32.mxu0 0.0
        %475 = vmatmul.mubr.f32.gmra.mrb[0].mxu0 %v291
        %v476 = vpop.f32.mrb[0].mxu0
        %v477 = vadd.f32 0.0, %v476
        %v478 = vpop.f32.mrb[0].mxu0
        %479 = vmatprep.mubr.f32.mxu0 0.0
        %480 = vmatmul.mubr.f32.gmra.mrb[0].mxu0 %v294
        %v481 = vpop.f32.mrb[0].mxu0
        %v482 = vadd.f32 0.0, %v481
        %v483 = vpop.f32.mrb[0].mxu0
        %484 = vmatprep.mubr.f32.mxu0 0.0
        %485 = vmatmul.mubr.f32.gmra.mrb[0].mxu0 %v297
        %v486 = vpop.f32.mrb[0].mxu0
        %v487 = vadd.f32 0.0, %v486
        %v488 = vpop.f32.mrb[0].mxu0
        %489 = vmatprep.mubr.f32.mxu0 0.0
        %490 = vmatmul.mubr.f32.gmra.mrb[0].mxu0 %v300
        %v491 = vpop.f32.mrb[0].mxu0
        %v492 = vadd.f32 0.0, %v491
        %v493 = vpop.f32.mrb[0].mxu0
        %494 = vmatprep.mubr.f32.mxu0 0.0
        %495 = vmatmul.mubr.f32.gmra.mrb[0].mxu0 %v303
        %v496 = vpop.f32.mrb[0].mxu0
        %v497 = vadd.f32 0.0, %v496
        %v498 = vpop.f32.mrb[0].mxu0
        %499 = vmatprep.mubr.f32.mxu0 0.0
        %500 = vmatmul.mubr.f32.gmra.mrb[0].mxu0 %v306
        %v501 = vpop.f32.mrb[0].mxu0
        %v502 = vadd.f32 0.0, %v501
        %v503 = vpop.f32.mrb[0].mxu0
        %504 = vmatprep.mubr.f32.mxu0 0.0
        %505 = vmatmul.mubr.f32.gmra.mrb[0].mxu0 %v309
        %v506 = vpop.f32.mrb[0].mxu0
        %v507 = vadd.f32 0.0, %v506
        %v508 = vpop.f32.mrb[0].mxu0
        %509 = vmatprep.mubr.f32.mxu0 0.0
        %510 = vmatmul.mubr.f32.gmra.mrb[0].mxu0 %v312
        %v511 = vpop.f32.mrb[0].mxu0
        %v512 = vadd.f32 0.0, %v511
        %v513 = vpop.f32.mrb[0].mxu0
        %514 = vmatprep.mubr.f32.mxu0 0.0
        %515 = vmatmul.mubr.f32.gmra.mrb[0].mxu0 %v315
        %v516 = vpop.f32.mrb[0].mxu0
        %v517 = vadd.f32 0.0, %v516
        %v518 = vpop.f32.mrb[0].mxu0
        %519 = vmatprep.mubr.f32.mxu0 0.0
        %520 = vmatmul.mubr.f32.gmra.mrb[0].mxu0 %v318
        %v521 = vpop.f32.mrb[0].mxu0
        %v522 = vadd.f32 0.0, %v521
        %v523 = vpop.f32.mrb[0].mxu0
        %524 = vmatprep.mubr.f32.mxu0 0.0
        %525 = vmatmul.mubr.f32.gmra.mrb[0].mxu0 %v321
        %v526 = vpop.f32.mrb[0].mxu0
        %v527 = vadd.f32 0.0, %v526
        %v528 = vpop.f32.mrb[0].mxu0
        %529 = vmatprep.mubr.f32.mxu0 0.0
        %530 = vmatmul.mubr.f32.gmra.mrb[0].mxu0 %v324
        %v531 = vpop.f32.mrb[0].mxu0
        %v532 = vadd.f32 0.0, %v531
        %v533 = vpop.f32.mrb[0].mxu0
        %534 = vmatprep.mubr.f32.mxu0 0.0
        %535 = vmatmul.mubr.f32.gmra.mrb[0].mxu0 %v327
        %v536 = vpop.f32.mrb[0].mxu0
        %v537 = vadd.f32 0.0, %v536
        %v538 = vpop.f32.mrb[0].mxu0
        %539 = vmatprep.mubr.f32.mxu0 0.0
        %540 = vmatmul.mubr.f32.gmra.mrb[0].mxu0 %v330
        %v541 = vpop.f32.mrb[0].mxu0
        %v542 = vadd.f32 0.0, %v541
        %v543 = vpop.f32.mrb[0].mxu0
        %544 = vmatprep.mubr.f32.mxu0 0.0
        %545 = vmatmul.mubr.f32.gmra.mrb[0].mxu0 %v333
        %v546 = vpop.f32.mrb[0].mxu0
        %v547 = vadd.f32 0.0, %v546
        %v548 = vpop.f32.mrb[0].mxu0
        %549 = vmatprep.mubr.f32.mxu0 0.0
        %550 = vmatmul.mubr.f32.gmra.mrb[0].mxu0 %v336
        %v551 = vpop.f32.mrb[0].mxu0
        %v552 = vadd.f32 0.0, %v551
        %v553 = vpop.f32.mrb[0].mxu0
        %554 = vmatprep.mubr.f32.mxu0 0.0
        %555 = vmatmul.mubr.f32.gmra.mrb[0].mxu0 %v339
        %v556 = vpop.f32.mrb[0].mxu0
        %v557 = vadd.f32 0.0, %v556
        %v558 = vpop.f32.mrb[0].mxu0
        %559 = vmatprep.mubr.f32.mxu0 0.0
        %560 = vmatmul.mubr.f32.gmra.mrb[0].mxu0 %v342
        %v561 = vpop.f32.mrb[0].mxu0
        %v562 = vadd.f32 0.0, %v561
        %v563 = vpop.f32.mrb[0].mxu0
        %564 = vmatprep.mubr.f32.mxu0 0.0
        %565 = vmatmul.mubr.f32.gmra.mrb[0].mxu0 %v345
        %v566 = vpop.f32.mrb[0].mxu0
        %v567 = vadd.f32 0.0, %v566
        %v568 = vpop.f32.mrb[0].mxu0
        %569 = vmatprep.mubr.f32.mxu0 0.0
        %570 = vmatmul.mubr.f32.gmra.mrb[0].mxu0 %v348
        %v571 = vpop.f32.mrb[0].mxu0
        %v572 = vadd.f32 0.0, %v571
        %v573 = vpop.f32.mrb[0].mxu0
        %574 = vdwg.mxu0
        %p575 = scmp.eq.s32.totalorder %s23, 0
        // Predicated region
        $region29: #{tpu_custom_call.1} parent=27 // pred_check
          %p576 = pneg %p575
        $region30: #{tpu_custom_call.1} parent=27 // pred_check_branch
          %578 = sbr.rel (%p576) target = $region32
        $region31: #{tpu_custom_call.1} parent=27 // pred_region
          %vm579 = vcmask 253952
          %580 = vst.msk [vmem:[%s199] sm:$0x1] %vm579, 0.0
        $region32: #{tpu_custom_call.1} parent=27 // pred_fallthru
          _
        %v581 = vld [vmem:[%s199] sm:$0x1]
        %vm582 = vcmask 261120
        %v583 = vsel %vm582, %v417, 0.0
        %v584 = vsel %vm582, %v422, 0.0
        %v585 = vadd.f32 %v583, %v584
        %v586 = vsel %vm582, %v427, 0.0
        %v587 = vadd.f32 %v585, %v586
        %v588 = vsel %vm582, %v432, 0.0
        %v589 = vadd.f32 %v587, %v588
        %v590 = vsel %vm582, %v437, 0.0
        %v591 = vadd.f32 %v589, %v590
        %v592 = vsel %vm582, %v442, 0.0
        %v593 = vadd.f32 %v591, %v592
        %v594 = vsel %vm582, %v447, 0.0
        %v595 = vadd.f32 %v593, %v594
        %v596 = vsel %vm582, %v452, 0.0
        %v597 = vadd.f32 %v595, %v596
        %v598 = vsel %vm582, %v457, 0.0
        %v599 = vadd.f32 %v597, %v598
        %v600 = vsel %vm582, %v462, 0.0
        %v601 = vadd.f32 %v599, %v600
        %v602 = vsel %vm582, %v467, 0.0
        %v603 = vadd.f32 %v601, %v602
        %v604 = vsel %vm582, %v472, 0.0
        %v605 = vadd.f32 %v603, %v604
        %v606 = vsel %vm582, %v477, 0.0
        %v607 = vadd.f32 %v605, %v606
        %v608 = vsel %vm582, %v482, 0.0
        %v609 = vadd.f32 %v607, %v608
        %v610 = vsel %vm582, %v487, 0.0
        %v611 = vadd.f32 %v609, %v610
        %v612 = vsel %vm582, %v492, 0.0
        %v613 = vadd.f32 %v611, %v612
        %v614 = vsel %vm582, %v497, 0.0
        %v615 = vadd.f32 %v613, %v614
        %v616 = vsel %vm582, %v502, 0.0
        %v617 = vadd.f32 %v615, %v616
        %v618 = vsel %vm582, %v507, 0.0
        %v619 = vadd.f32 %v617, %v618
        %v620 = vsel %vm582, %v512, 0.0
        %v621 = vadd.f32 %v619, %v620
        %v622 = vsel %vm582, %v517, 0.0
        %v623 = vadd.f32 %v621, %v622
        %v624 = vsel %vm582, %v522, 0.0
        %v625 = vadd.f32 %v623, %v624
        %v626 = vsel %vm582, %v527, 0.0
        %v627 = vadd.f32 %v625, %v626
        %v628 = vsel %vm582, %v532, 0.0
        %v629 = vadd.f32 %v627, %v628
        %v630 = vsel %vm582, %v537, 0.0
        %v631 = vadd.f32 %v629, %v630
        %v632 = vsel %vm582, %v542, 0.0
        %v633 = vadd.f32 %v631, %v632
        %v634 = vsel %vm582, %v547, 0.0
        %v635 = vadd.f32 %v633, %v634
        %v636 = vsel %vm582, %v552, 0.0
        %v637 = vadd.f32 %v635, %v636
        %v638 = vsel %vm582, %v557, 0.0
        %v639 = vadd.f32 %v637, %v638
        %v640 = vsel %vm582, %v562, 0.0
        %v641 = vadd.f32 %v639, %v640
        %v642 = vsel %vm582, %v567, 0.0
        %v643 = vadd.f32 %v641, %v642
        %v644 = vsel %vm582, %v572, 0.0
        %v645 = vadd.f32 %v643, %v644
        %v646 = vrot.slane %v645, 4
        %v647 = vadd.f32 %v645, %v646
        %v648 = vrot.slane %v647, 2
        %v649 = vadd.f32 %v647, %v648
        %v650 = vrot.slane %v649, 1
        %v651 = vadd.f32 %v649, %v650
        %v652 = vadd.f32 %v581, %v651
        %vm653 = vcmask 253952
        %654 = vst.msk [vmem:[%s199] sm:$0x1] %vm653, %v652
        %655 = vst.msk [vmem:[%s218] sm:$0xff] %vm582, %v417
        %656 = vst.msk [vmem:[%s218 + $0x8] sm:$0xff] %vm582, %v422
        %657 = vst.msk [vmem:[%s218 + $0x10] sm:$0xff] %vm582, %v427
        %658 = vst.msk [vmem:[%s218 + $0x18] sm:$0xff] %vm582, %v432
        %659 = vst.msk [vmem:[%s218 + $0x20] sm:$0xff] %vm582, %v437
        %660 = vst.msk [vmem:[%s218 + $0x28] sm:$0xff] %vm582, %v442
        %661 = vst.msk [vmem:[%s218 + $0x30] sm:$0xff] %vm582, %v447
        %662 = vst.msk [vmem:[%s218 + $0x38] sm:$0xff] %vm582, %v452
        %663 = vst.msk [vmem:[%s218 + $0x40] sm:$0xff] %vm582, %v457
        %664 = vst.msk [vmem:[%s218 + $0x48] sm:$0xff] %vm582, %v462
        %665 = vst.msk [vmem:[%s218 + $0x50] sm:$0xff] %vm582, %v467
        %666 = vst.msk [vmem:[%s218 + $0x58] sm:$0xff] %vm582, %v472
        %667 = vst.msk [vmem:[%s218 + $0x60] sm:$0xff] %vm582, %v477
        %668 = vst.msk [vmem:[%s218 + $0x68] sm:$0xff] %vm582, %v482
        %669 = vst.msk [vmem:[%s218 + $0x70] sm:$0xff] %vm582, %v487
        %670 = vst.msk [vmem:[%s218 + $0x78] sm:$0xff] %vm582, %v492
        %671 = vst.msk [vmem:[%s218 + $0x80] sm:$0xff] %vm582, %v497
        %672 = vst.msk [vmem:[%s218 + $0x88] sm:$0xff] %vm582, %v502
        %673 = vst.msk [vmem:[%s218 + $0x90] sm:$0xff] %vm582, %v507
        %674 = vst.msk [vmem:[%s218 + $0x98] sm:$0xff] %vm582, %v512
        %675 = vst.msk [vmem:[%s218 + $0xa0] sm:$0xff] %vm582, %v517
        %676 = vst.msk [vmem:[%s218 + $0xa8] sm:$0xff] %vm582, %v522
        %677 = vst.msk [vmem:[%s218 + $0xb0] sm:$0xff] %vm582, %v527
        %678 = vst.msk [vmem:[%s218 + $0xb8] sm:$0xff] %vm582, %v532
        %679 = vst.msk [vmem:[%s218 + $0xc0] sm:$0xff] %vm582, %v537
        %680 = vst.msk [vmem:[%s218 + $0xc8] sm:$0xff] %vm582, %v542
        %681 = vst.msk [vmem:[%s218 + $0xd0] sm:$0xff] %vm582, %v547
        %682 = vst.msk [vmem:[%s218 + $0xd8] sm:$0xff] %vm582, %v552
        %683 = vst.msk [vmem:[%s218 + $0xe0] sm:$0xff] %vm582, %v557
        %684 = vst.msk [vmem:[%s218 + $0xe8] sm:$0xff] %vm582, %v562
        %685 = vst.msk [vmem:[%s218 + $0xf0] sm:$0xff] %vm582, %v567
        %686 = vst.msk [vmem:[%s218 + $0xf8] sm:$0xff] %vm582, %v572
        %s687 = smul.u32 32, %s23
        %p688 = scmp.lt.s32.totalorder %s22, 1
        %s689 = scalar_select %p688, %s22, 1
        %p690 = scmp.lt.s32.totalorder %s687, 31
        %s691 = scalar_select %p690, %s687, 31
        %s692 = smul.addr %s689, 32
        %s693 = sadd.s32 %s691, %s692
        %s694 = smul.addr %s693, 8
        %s695 = scalar_lea.vmem %s2, %s694
        %s696 = sand.u32 %s115, 1
        %s697 = scalar_lea.sflag [#allocation3], %s696
        %s698 = sand.u32 %s115, 1
        %s699 = scalar_lea.vmem [#allocation2], %s698
        // Predicated region
        $region33: #{tpu_custom_call.1} parent=27 // pred_check
          %p700 = pneg %p99
        $region34: #{tpu_custom_call.1} parent=27 // pred_check_branch
          %702 = sbr.rel (%p700) target = $region36
        $region35: #{tpu_custom_call.1} parent=27 // pred_region
          %s703 = smul.u32 32, %s23
        $region36: #{tpu_custom_call.1} parent=27 // pred_fallthru
          _
        // Predicated region
        $region37: #{tpu_custom_call.1} parent=27 // pred_check
          %p704 = pneg %p125
        $region38: #{tpu_custom_call.1} parent=27 // pred_check_branch
          %706 = sbr.rel (%p704) target = $region40
        $region39: #{tpu_custom_call.1} parent=27 // pred_region
          %s708 = ssub.s32 16, 16
          %709 = vsyncadd %s697, %s708
          %s710 = smul.addr %s22, 16
          %s711 = scalar_lea.hbm %s3, %s710
          %s713 = sshll.u32 %s699, 4
          %s714 = int_to_ptr.vmem [resolvable:$true] %s713
          %716 = dma.vmem_to_hbm [thread:$0]  %s714, 16, %s711, %s697
        $region40: #{tpu_custom_call.1} parent=27 // pred_fallthru
          _
      $region28: #{tpu_custom_call.1} parent=5 // pred_fallthru
        _
      %p717 = scmp.le.s32.totalorder 2, %s13
      // Predicated region
      $region41: #{tpu_custom_call.1} parent=5 // pred_check
        %p718 = pneg %p717
      $region42: #{tpu_custom_call.1} parent=5 // pred_check_branch
        %720 = sbr.rel (%p718) target = $region44
      $region43: #{tpu_custom_call.1} parent=5 // pred_region
        %s721 = ssub.s32 %s13, 2
        // Predicated region
        $region45: #{tpu_custom_call.1} parent=43 // pred_check
          %p722 = pneg %p105
        $region46: #{tpu_custom_call.1} parent=43 // pred_check_branch
          %724 = sbr.rel (%p722) target = $region48
        $region47: #{tpu_custom_call.1} parent=43 // pred_region
          %s725 = smul.u32 32, %s25
          %p726 = scmp.lt.s32.totalorder %s24, 1
          %s727 = scalar_select %p726, %s24, 1
          %p728 = scmp.lt.s32.totalorder %s725, 31
          %s729 = scalar_select %p728, %s725, 31
          %s730 = smul.addr %s727, 32
          %s731 = sadd.s32 %s729, %s730
          %s732 = smul.addr %s731, 8
          %s733 = scalar_lea.vmem %s2, %s732
        $region48: #{tpu_custom_call.1} parent=43 // pred_fallthru
          _
        // Predicated region
        $region49: #{tpu_custom_call.1} parent=43 // pred_check
          %p734 = pneg %p131
        $region50: #{tpu_custom_call.1} parent=43 // pred_check_branch
          %736 = sbr.rel (%p734) target = $region52
        $region51: #{tpu_custom_call.1} parent=43 // pred_region
          %s737 = sand.u32 %s116, 1
          %s738 = scalar_lea.sflag [#allocation3], %s737
          %s739 = sand.u32 %s116, 1
          %s740 = scalar_lea.vmem [#allocation2], %s739
          %741 = dma.done %s738, 16
        $region52: #{tpu_custom_call.1} parent=43 // pred_fallthru
          _
      $region44: #{tpu_custom_call.1} parent=5 // pred_fallthru
        _
    $region6: #{tpu_custom_call.1} parent=1 // loop_footer
      %s17 = sadd.s32 1, %s13
    $region7: #{tpu_custom_call.1} parent=1 // loop_footer_branch
      %12 = sbr.rel target = $region3
    $region8: #{tpu_custom_call.1} parent=1 // loop_exit
      _
    %742 = vsyncpa [#allocation3], 1
    %s743 = scalar_lea.sflag [#allocation3], 1
    %744 = vsyncpa %s743, 1

</llo_original>
